<compile_context>
chip_gen: v7x
topology: tpu7x:2x2x1
jax: 0.10.0
libtpu: 0.0.40
codegen_flags: <defaults>
</compile_context>

<pallas_src>
import jax
import jax.numpy as jnp
from jax.experimental import pallas as pl
from jax.experimental.pallas import tpu as pltpu

HIDDEN = 512   # fixed by the module definition
LANE = 128
SUBLANE = 8


def _round_up(x, m):
    return (x + m - 1) // m * m


def _block_spec(block_shape, index_map, n_buffers=None):
    """BlockSpec with an optional explicit buffer count (graceful fallback)."""
    if n_buffers is None:
        return pl.BlockSpec(block_shape, index_map)
    try:
        return pl.BlockSpec(block_shape, index_map,
                            pipeline_mode=pl.Buffered(n_buffers))
    except (TypeError, AttributeError):
        return pl.BlockSpec(block_shape, index_map)


def _vmem_budget():
    try:
        physical = int(pltpu.get_tpu_info().vmem_capacity_bytes)
    except Exception:
        physical = 64 << 20          # conservative (v7x) fallback
    return int(physical * 0.85)      # leave headroom for Mosaic scratch


# ----------------------------------------------------------------------------
# Kernel
# ----------------------------------------------------------------------------
def mlp_kernel(x_ref, w1_ref, b1_ref, w2_ref, b2_ref, o_ref, h_ref):
    # Hidden activation is computed once per batch tile (first column tile of
    # the sequential axis 1) and kept in VMEM scratch for the remaining
    # column tiles.
    @pl.when(pl.program_id(1) == 0)
    def _():
        h = jnp.dot(x_ref[...].astype(w1_ref.dtype), w1_ref[...],
                    preferred_element_type=jnp.float32)
        h_ref[...] = jnp.maximum(h + b1_ref[...], 0.0)       # f32 epilogue

    out = jnp.dot(h_ref[...].astype(w2_ref.dtype), w2_ref[...],
                  preferred_element_type=jnp.float32)
    o_ref[...] = (out + b2_ref[...]).astype(o_ref.dtype)


# ----------------------------------------------------------------------------
# Parameter preparation (done ONCE, reused across forward calls)
# ----------------------------------------------------------------------------
def prepare_params(w1, b1, w2, b2):
    """w1:(K,512) b1:(1,512) w2:(512,N) b2:(1,N)  ->  cached padded/bf16 set."""
    n_inputs = w1.shape[0]
    n_targets = w2.shape[1]
    Np = _round_up(n_targets, LANE)                       # lane-dense output slab
    w1p = jnp.asarray(w1, jnp.float32).astype(jnp.bfloat16)
    b1p = jnp.asarray(b1, jnp.float32).reshape(1, HIDDEN)
    w2p = jnp.zeros((HIDDEN, Np), jnp.bfloat16).at[:, :n_targets].set(
        jnp.asarray(w2, jnp.float32).astype(jnp.bfloat16))
    b2p = jnp.zeros((1, Np), jnp.float32).at[:, :n_targets].set(
        jnp.asarray(b2, jnp.float32).reshape(1, n_targets))
    return dict(w1=w1p, b1=b1p, w2=w2p, b2=b2p,
                n_inputs=n_inputs, n_targets=n_targets, Np=Np)


# ----------------------------------------------------------------------------
# Tiling selection (VMEM-budget aware; keeps TB=512 by tiling N first)
# ----------------------------------------------------------------------------
def _choose_tiling(B, Kin, Np, block_rows, out_itemsize, budget):
    TB = _round_up(min(block_rows, _round_up(B, SUBLANE)), SUBLANE)

    def footprint(tb, tn):
        n_tiles_n = Np // tn
        w2_bufs = 1 if n_tiles_n == 1 else 2
        return (2 * tb * Kin * 4                        # x tiles (f32, dbl-buf)
                + Kin * HIDDEN * 2 + HIDDEN * 4         # w1 + b1 (single buffer)
                + w2_bufs * (HIDDEN * tn * 2 + tn * 4)  # w2 / b2 column tiles
                + 2 * tb * tn * out_itemsize            # output tiles (dbl-buf)
                + tb * HIDDEN * 4)                      # hidden scratch

    n_units = Np // LANE
    tn_candidates = [d * LANE for d in range(n_units, 0, -1) if n_units % d == 0]
    TN = tn_candidates[-1]
    for cand in tn_candidates:                          # largest TN that fits
        if footprint(TB, cand) <= budget:
            TN = cand
            break
    while footprint(TB, TN) > budget and TB > SUBLANE:  # last resort: shrink TB
        TB = max(SUBLANE, _round_up(TB // 2, SUBLANE))
    # TODO(synk): tile the contraction (n_inputs) axis with an f32 accumulator
    # if even a (8, n_inputs) x-block exceeds the v7x VMEM budget.
    return TB, TN, footprint(TB, TN)


# ----------------------------------------------------------------------------
# Forward
# ----------------------------------------------------------------------------
def mlp_forward(x, params, *, block_rows=512, out_dtype=jnp.float32):
    """x: (B, n_inputs) f32; params: output of prepare_params()."""
    B, Kin = x.shape
    assert Kin == params["n_inputs"]
    n_targets, Np = params["n_targets"], params["Np"]
    out_itemsize = jnp.dtype(out_dtype).itemsize

    budget = _vmem_budget()
    TB, TN, fp_bytes = _choose_tiling(B, Kin, Np, block_rows, out_itemsize, budget)
    num_b = pl.cdiv(B, TB)
    num_n = Np // TN
    w2_buffers = 1 if num_n == 1 else None   # constant index map -> single buffer

    vmem_limit = int(min(budget, fp_bytes * 3 // 2 + (2 << 20)))

    flops = 2 * B * (Kin * HIDDEN + HIDDEN * Np)
    bytes_accessed = (B * Kin * 4 + Kin * HIDDEN * 2 + HIDDEN * 4
                      + HIDDEN * Np * 2 + Np * 4 + B * Np * out_itemsize)
    cost = pl.CostEstimate(flops=flops, transcendentals=0,
                           bytes_accessed=bytes_accessed)

    out_padded = pl.pallas_call(
        mlp_kernel,
        out_shape=jax.ShapeDtypeStruct((B, Np), out_dtype),
        grid_spec=pltpu.PrefetchScalarGridSpec(
            num_scalar_prefetch=0,
            grid=(num_b, num_n),
            in_specs=[
                pl.BlockSpec((TB, Kin), lambda i, j: (i, 0)),        # x walks batch
                _block_spec((Kin, HIDDEN), lambda i, j: (0, 0), 1),  # resident w1
                _block_spec((1, HIDDEN), lambda i, j: (0, 0), 1),    # resident b1
                _block_spec((HIDDEN, TN), lambda i, j: (0, j), w2_buffers),
                _block_spec((1, TN), lambda i, j: (0, j), w2_buffers),
            ],
            out_specs=pl.BlockSpec((TB, TN), lambda i, j: (i, j)),
            scratch_shapes=[pltpu.VMEM((TB, HIDDEN), jnp.float32)],  # hidden act
        ),
        compiler_params=pltpu.CompilerParams(
            dimension_semantics=("parallel", "arbitrary"),
            vmem_limit_bytes=vmem_limit,
        ),
        cost_estimate=cost,
    )(x, params["w1"], params["b1"], params["w2"], params["b2"])

    if Np != n_targets:
        return out_padded[:, :n_targets]
    return out_padded


# ----------------------------------------------------------------------------
# Init (matches nn.Linear's U(-1/sqrt(fan_in), 1/sqrt(fan_in)))
# ----------------------------------------------------------------------------
def init_params(key, n_inputs, n_targets):
    k1, k2, k3, k4 = jax.random.split(key, 4)
    bound1 = 1.0 / jnp.sqrt(jnp.float32(n_inputs))
    bound2 = 1.0 / jnp.sqrt(jnp.float32(HIDDEN))
    w1 = jax.random.uniform(k1, (n_inputs, HIDDEN), jnp.float32, -bound1, bound1)
    b1 = jax.random.uniform(k2, (1, HIDDEN), jnp.float32, -bound1, bound1)
    w2 = jax.random.uniform(k3, (HIDDEN, n_targets), jnp.float32, -bound2, bound2)
    b2 = jax.random.uniform(k4, (1, n_targets), jnp.float32, -bound2, bound2)
    return w1, b1, w2, b2


if __name__ == "__main__":
    key = jax.random.PRNGKey(0)
    kx, kp, kx2, kx3 = jax.random.split(key, 4)

    n_inputs, n_targets = 32, 16
    w1, b1, w2, b2 = init_params(kp, n_inputs, n_targets)
    params = prepare_params(w1, b1, w2, b2)          # pad/cast weights ONCE

    def reference(x):
        return jnp.maximum(x @ w1 + b1, 0.0) @ w2 + b2

    # 1) Small single-tile run.
    B = 8
    x = jax.random.normal(kx, (B, n_inputs), jnp.float32)
    out = mlp_forward(x, params)
    jax.block_until_ready(out)
    assert out.shape == (B, n_targets)
    assert jnp.allclose(out, reference(x), atol=2e-2, rtol=2e-2)

    # 2) Multi batch-tile run (3 exact tiles).
    B2 = 24
    x2 = jax.random.normal(kx2, (B2, n_inputs), jnp.float32)
    out2 = mlp_forward(x2, params, block_rows=8)
    jax.block_until_ready(out2)
    assert out2.shape == (B2, n_targets)
    assert jnp.allclose(out2, reference(x2), atol=2e-2, rtol=2e-2)

    # 3) Ragged last batch tile (B not a multiple of TB; exercises masking).
    B3 = 20
    x3 = jax.random.normal(kx3, (B3, n_inputs), jnp.float32)
    out3 = mlp_forward(x3, params, block_rows=8)
    jax.block_until_ready(out3)
    assert out3.shape == (B3, n_targets)
    assert jnp.allclose(out3, reference(x3), atol=2e-2, rtol=2e-2)

    print("KERNEL_OK")
</pallas_src>

<mosaic_0001>
module attributes {stable_mosaic.version = 11 : i64} {
  func.func @mlp_kernel(%arg0: i32, %arg1: i32, %arg2: memref<8x32xf32, #tpu.memory_space<vmem>>, %arg3: memref<32x512xbf16, #tpu.memory_space<vmem>>, %arg4: memref<1x512xf32, #tpu.memory_space<vmem>>, %arg5: memref<512x128xbf16, #tpu.memory_space<vmem>>, %arg6: memref<1x128xf32, #tpu.memory_space<vmem>>, %arg7: memref<8x128xf32, #tpu.memory_space<vmem>>, %arg8: memref<8x512xf32, #tpu.memory_space<vmem>>) attributes {dimension_semantics = [#tpu.dimension_semantics<parallel>, #tpu.dimension_semantics<arbitrary>], iteration_bounds = array<i64: 1, 1>, scalar_prefetch = 0 : i64, scratch_operands = 1 : i64, tpu.core_type = #tpu.core_type<tc>, window_params = [{transform_indices = @transform_0, window_bounds = array<i64: 8, 32>}, {pipeline_mode = #tpu.pipeline_mode<synchronous>, transform_indices = @transform_1, window_bounds = array<i64: 32, 512>}, {pipeline_mode = #tpu.pipeline_mode<synchronous>, transform_indices = @transform_2, window_bounds = array<i64: 1, 512>}, {pipeline_mode = #tpu.pipeline_mode<synchronous>, transform_indices = @transform_3, window_bounds = array<i64: 512, 128>}, {pipeline_mode = #tpu.pipeline_mode<synchronous>, transform_indices = @transform_4, window_bounds = array<i64: 1, 128>}, {transform_indices = @transform_5, window_bounds = array<i64: 8, 128>}]} {
    %c0_i32 = arith.constant 0 : i32
    %0 = arith.cmpi eq, %arg1, %c0_i32 : i32
    %1 = arith.extui %0 : i1 to i32
    %c0_i32_0 = arith.constant 0 : i32
    %2 = arith.cmpi ne, %1, %c0_i32_0 : i32
    scf.if %2 {
      %c0_8 = arith.constant 0 : index
      %c0_9 = arith.constant 0 : index
      %11 = vector.load %arg2[%c0_8, %c0_9] : memref<8x32xf32, #tpu.memory_space<vmem>>, vector<8x32xf32>
      %12 = arith.truncf %11 : vector<8x32xf32> to vector<8x32xbf16>
      %c0_10 = arith.constant 0 : index
      %c0_11 = arith.constant 0 : index
      %13 = vector.load %arg3[%c0_10, %c0_11] : memref<32x512xbf16, #tpu.memory_space<vmem>>, vector<32x512xbf16>
      %cst_12 = arith.constant dense<0.000000e+00> : vector<8x512xf32>
      %14 = tpu.matmul %12, %13, %cst_12 {dimension_numbers = #tpu.dot_dimension_numbers<[1], [0], [0], [1], [0, 0, 1, 1], [], []>} : vector<8x32xbf16>, vector<32x512xbf16>, vector<8x512xf32> -> vector<8x512xf32>
      %c0_13 = arith.constant 0 : index
      %c0_14 = arith.constant 0 : index
      %15 = vector.load %arg4[%c0_13, %c0_14] : memref<1x512xf32, #tpu.memory_space<vmem>>, vector<1x512xf32>
      %16 = vector.broadcast %15 : vector<1x512xf32> to vector<8x512xf32>
      %17 = arith.addf %14, %16 : vector<8x512xf32>
      %cst_15 = arith.constant 0.000000e+00 : f32
      %18 = vector.broadcast %cst_15 : f32 to vector<8x512xf32>
      %19 = arith.maximumf %17, %18 : vector<8x512xf32>
      %c0_16 = arith.constant 0 : index
      %c0_17 = arith.constant 0 : index
      %20 = vector.load %arg8[%c0_16, %c0_17] : memref<8x512xf32, #tpu.memory_space<vmem>>, vector<8x512xf32>
      tpu.vector_store %arg8[%c0_16, %c0_17], %19 {strides = array<i32>} : memref<8x512xf32, #tpu.memory_space<vmem>>, vector<8x512xf32>,
    } else {
    }
    %c0 = arith.constant 0 : index
    %c0_1 = arith.constant 0 : index
    %3 = vector.load %arg8[%c0, %c0_1] : memref<8x512xf32, #tpu.memory_space<vmem>>, vector<8x512xf32>
    %4 = arith.truncf %3 : vector<8x512xf32> to vector<8x512xbf16>
    %c0_2 = arith.constant 0 : index
    %c0_3 = arith.constant 0 : index
    %5 = vector.load %arg5[%c0_2, %c0_3] : memref<512x128xbf16, #tpu.memory_space<vmem>>, vector<512x128xbf16>
    %cst = arith.constant dense<0.000000e+00> : vector<8x128xf32>
    %6 = tpu.matmul %4, %5, %cst {dimension_numbers = #tpu.dot_dimension_numbers<[1], [0], [0], [1], [0, 0, 1, 1], [], []>} : vector<8x512xbf16>, vector<512x128xbf16>, vector<8x128xf32> -> vector<8x128xf32>
    %c0_4 = arith.constant 0 : index
    %c0_5 = arith.constant 0 : index
    %7 = vector.load %arg6[%c0_4, %c0_5] : memref<1x128xf32, #tpu.memory_space<vmem>>, vector<1x128xf32>
    %8 = vector.broadcast %7 : vector<1x128xf32> to vector<8x128xf32>
    %9 = arith.addf %6, %8 : vector<8x128xf32>
    %c0_6 = arith.constant 0 : index
    %c0_7 = arith.constant 0 : index
    %10 = vector.load %arg7[%c0_6, %c0_7] : memref<8x128xf32, #tpu.memory_space<vmem>>, vector<8x128xf32>
    tpu.vector_store %arg7[%c0_6, %c0_7], %9 {strides = array<i32>} : memref<8x128xf32, #tpu.memory_space<vmem>>, vector<8x128xf32>,
    return
  }
  func.func @transform_0(%arg0: i32, %arg1: i32) -> (i32, i32) {
    %c0_i32 = arith.constant 0 : i32
    %c0_i32_0 = arith.constant 0 : i32
    return %arg0, %c0_i32 : i32, i32
  }
  func.func @transform_1(%arg0: i32, %arg1: i32) -> (i32, i32) {
    %c0_i32 = arith.constant 0 : i32
    %c0_i32_0 = arith.constant 0 : i32
    %c0_i32_1 = arith.constant 0 : i32
    return %c0_i32, %c0_i32_0 : i32, i32
  }
  func.func @transform_2(%arg0: i32, %arg1: i32) -> (i32, i32) {
    %c0_i32 = arith.constant 0 : i32
    %c0_i32_0 = arith.constant 0 : i32
    %c0_i32_1 = arith.constant 0 : i32
    return %c0_i32, %c0_i32_0 : i32, i32
  }
  func.func @transform_3(%arg0: i32, %arg1: i32) -> (i32, i32) {
    %c0_i32 = arith.constant 0 : i32
    %c0_i32_0 = arith.constant 0 : i32
    return %c0_i32, %arg1 : i32, i32
  }
  func.func @transform_4(%arg0: i32, %arg1: i32) -> (i32, i32) {
    %c0_i32 = arith.constant 0 : i32
    %c0_i32_0 = arith.constant 0 : i32
    return %c0_i32, %arg1 : i32, i32
  }
  func.func @transform_5(%arg0: i32, %arg1: i32) -> (i32, i32) {
    %c0_i32 = arith.constant 0 : i32
    return %arg0, %arg1 : i32, i32
  }
}

</mosaic_0001>

<llo_original>
// kernel: tpu_custom_call.1
$region0: #{tpu_custom_call.1}
  #allocation0 [shape = 'u32[]', space=smem, size = 0x4, offset = 0x4, fixed_abs, tag = 'smem constant byte address 0x4 - core index']
  #allocation1 [shape = 'u32[144,128]{1,0:T(1,128)}', space=vmem, size = 0x12000, scoped, tag = 'internal scratch']
  #allocation2 [shape = 'f32[8,512]{1,0:T(8,128)}', space=vmem, size = 0x4000, scoped, tag = 'scratch operand']
  %s0 = inlined_call_operand.hbm [shape: f32[8,32], index: 0, kind: input, shape index: {}]
  %s1 = inlined_call_operand.hbm [shape: bf16[32,512], index: 1, kind: input, shape index: {}]
  %s2 = inlined_call_operand.vmem [shape: f32[1,512], index: 2, kind: input, shape index: {}]
  %s3 = inlined_call_operand.hbm [shape: bf16[512,128], index: 3, kind: input, shape index: {}]
  %s4 = inlined_call_operand.vmem [shape: f32[1,128], index: 4, kind: input, shape index: {}]
  %s5 = inlined_call_operand.hbm [shape: f32[8,128], index: 5, kind: output, shape index: {}]
  %s6 = sld [smem:[#allocation0]]
  $region46: #{tpu_custom_call.1} parent=0
    _
  %s8 = ssub.s32 1, %s6
  %s9 = scalar_select 0, %s8, %s6
  $region1: #{tpu_custom_call.1} parent=0
    #allocation3 [shape = 'u8[4096]{0}', space=vmem, size = 0x1000, scoped, tag = 'input window, operand 0, single buffered']
    #allocation4 [shape = 's32[1]{0}', space=sflag, size = 0x4, scoped, tag = 'scoped memory for tpu_custom_call.1']
    #allocation5 [shape = 's32[1]{0}', space=sflag, size = 0x4, scoped, tag = 'scoped memory for tpu_custom_call.1']
    #allocation6 [shape = 'u8[32768]{0}', space=vmem, size = 0x8000, scoped, tag = 'input window, operand 1, single buffered']
    #allocation7 [shape = 's32[1]{0}', space=sflag, size = 0x4, scoped, tag = 'scoped memory for tpu_custom_call.1']
    #allocation8 [shape = 'u8[131072]{0}', space=vmem, size = 0x20000, scoped, tag = 'input window, operand 3, single buffered']
    #allocation9 [shape = 'u8[4096]{0}', space=vmem, size = 0x1000, scoped, tag = 'output window, operand 0, single buffered']
    %10 = vsyncpa [#allocation4], 0
    %11 = vsyncpa [#allocation7], 0
    %12 = vsyncpa [#allocation5], 0
    // Predicated region
    $region2: #{tpu_custom_call.1} parent=1 // pred_check
      _
    $region3: #{tpu_custom_call.1} parent=1 // pred_check_branch
      %14 = sbr.rel (0) target = $region5
    $region4: #{tpu_custom_call.1} parent=1 // pred_region
      %s16 = ssub.s32 128, 128
      %17 = vsyncadd [#allocation4], %s16
      %s19 = sshll.u32 [#allocation3], 4
      %s20 = int_to_ptr.vmem [resolvable:$true] %s19
      %22 = dma.hbm_to_vmem [thread:$0]  %s0, 128, %s20, [#allocation4]
    $region5: #{tpu_custom_call.1} parent=1 // pred_fallthru
      _
    // Predicated region
    $region6: #{tpu_custom_call.1} parent=1 // pred_check
      _
    $region7: #{tpu_custom_call.1} parent=1 // pred_check_branch
      %24 = sbr.rel (0) target = $region9
    $region8: #{tpu_custom_call.1} parent=1 // pred_region
      %s26 = ssub.s32 1024, 1024
      %27 = vsyncadd [#allocation7], %s26
      %s28 = sshll.u32 [#allocation6], 4
      %s29 = int_to_ptr.vmem [resolvable:$true] %s28
      %34 = dma.hbm_to_vmem [thread:$0]  %s1, 1024, %s29, [#allocation7], 256, 256, 16
    $region9: #{tpu_custom_call.1} parent=1 // pred_fallthru
      _
    // Predicated region
    $region10: #{tpu_custom_call.1} parent=1 // pred_check
      _
    $region11: #{tpu_custom_call.1} parent=1 // pred_check_branch
      %36 = sbr.rel (0) target = $region13
    $region12: #{tpu_custom_call.1} parent=1 // pred_region
      _
    $region13: #{tpu_custom_call.1} parent=1 // pred_fallthru
      _
    // Predicated region
    $region14: #{tpu_custom_call.1} parent=1 // pred_check
      _
    $region15: #{tpu_custom_call.1} parent=1 // pred_check_branch
      %38 = sbr.rel (0) target = $region17
    $region16: #{tpu_custom_call.1} parent=1 // pred_region
      %s40 = ssub.s32 4096, 4096
      %41 = vsyncadd [#allocation7], %s40
      %s42 = sshll.u32 [#allocation8], 4
      %s43 = int_to_ptr.vmem [resolvable:$true] %s42
      %48 = dma.hbm_to_vmem [thread:$0]  %s3, 4096, %s43, [#allocation7], 64, 64, 4
    $region17: #{tpu_custom_call.1} parent=1 // pred_fallthru
      _
    // Predicated region
    $region18: #{tpu_custom_call.1} parent=1 // pred_check
      _
    $region19: #{tpu_custom_call.1} parent=1 // pred_check_branch
      %50 = sbr.rel (0) target = $region21
    $region20: #{tpu_custom_call.1} parent=1 // pred_region
      _
    $region21: #{tpu_custom_call.1} parent=1 // pred_fallthru
      _
    // Predicated region
    $region22: #{tpu_custom_call.1} parent=1 // pred_check
      _
    $region23: #{tpu_custom_call.1} parent=1 // pred_check_branch
      %52 = sbr.rel (0) target = $region25
    $region24: #{tpu_custom_call.1} parent=1 // pred_region
      %53 = dma.done [#allocation4], 128
    $region25: #{tpu_custom_call.1} parent=1 // pred_fallthru
      _
    // Predicated region
    $region26: #{tpu_custom_call.1} parent=1 // pred_check
      _
    $region27: #{tpu_custom_call.1} parent=1 // pred_check_branch
      %55 = sbr.rel (0) target = $region29
    $region28: #{tpu_custom_call.1} parent=1 // pred_region
      %56 = dma.done [#allocation7], 1024
    $region29: #{tpu_custom_call.1} parent=1 // pred_fallthru
      _
    // Predicated region
    $region30: #{tpu_custom_call.1} parent=1 // pred_check
      _
    $region31: #{tpu_custom_call.1} parent=1 // pred_check_branch
      %58 = sbr.rel (0) target = $region33
    $region32: #{tpu_custom_call.1} parent=1 // pred_region
      %59 = dma.done [#allocation7], 4096
    $region33: #{tpu_custom_call.1} parent=1 // pred_fallthru
      _
    %p61 = scmp.eq.s32.totalorder 0, 0
    // Predicated region
    $region34: #{tpu_custom_call.1} parent=1 // pred_check
      %p62 = pneg %p61
    $region35: #{tpu_custom_call.1} parent=1 // pred_check_branch
      %64 = sbr.rel (%p62) target = $region37
    $region36: #{tpu_custom_call.1} parent=1 // pred_region
      %v65 = vld [vmem:[#allocation3] sm:$0xff]
      %v66 = vpack.c.bf16 %v65, %v65
      %v67 = vld [vmem:[#allocation6] sm:$0xff]
      %v68 = vld [vmem:[#allocation6 + $0x8] sm:$0xff]
      %v69 = vld [vmem:[#allocation6 + $0x10] sm:$0xff]
      %v70 = vld [vmem:[#allocation6 + $0x18] sm:$0xff]
      %v71 = vld [vmem:[#allocation6 + $0x20] sm:$0xff]
      %v72 = vld [vmem:[#allocation6 + $0x28] sm:$0xff]
      %v73 = vld [vmem:[#allocation6 + $0x30] sm:$0xff]
      %v74 = vld [vmem:[#allocation6 + $0x38] sm:$0xff]
      %v75 = vld [vmem:[%s2] sm:$0xf]
      %v77 = vlaneseq
      %v78 = vshrl.u32 %v77, 7
      %v79 = vsub.s32 0, %v78
      %v80 = vrot.slane %v75, %v79
      %v81 = vlaneseq
      %v82 = vshrl.u32 %v81, 7
      %v83 = vsub.s32 1, %v82
      %v84 = vrot.slane %v75, %v83
      %v85 = vlaneseq
      %v86 = vshrl.u32 %v85, 7
      %v87 = vsub.s32 2, %v86
      %v88 = vrot.slane %v75, %v87
      %v89 = vlaneseq
      %v90 = vshrl.u32 %v89, 7
      %v91 = vsub.s32 3, %v90
      %v92 = vrot.slane %v75, %v91
      %v105 = vunpack.c.l.b16 %v67
      %v106 = vunpack.c.h.b16 %v67
      %v107 = vunpack.c.l.b16 %v68
      %v108 = vunpack.c.h.b16 %v68
      %v109 = vunpack.c.l.b16 %v69
      %v110 = vunpack.c.h.b16 %v69
      %v111 = vunpack.c.l.b16 %v70
      %v112 = vunpack.c.h.b16 %v70
      %v113 = vunpack.c.l.b16 %v71
      %v114 = vunpack.c.h.b16 %v71
      %v115 = vunpack.c.l.b16 %v72
      %v116 = vunpack.c.h.b16 %v72
      %v117 = vunpack.c.l.b16 %v73
      %v118 = vunpack.c.h.b16 %v73
      %v119 = vunpack.c.l.b16 %v74
      %v120 = vunpack.c.h.b16 %v74
      %v121 = vpack.c.b16 %v109, %v105
      %v122 = vpack.c.b16 %v110, %v106
      %v123 = vpack.c.b16 %v111, %v107
      %v124 = vpack.c.b16 %v112, %v108
      %v125 = vpack.c.b16 %v117, %v113
      %v126 = vpack.c.b16 %v118, %v114
      %v127 = vpack.c.b16 %v119, %v115
      %v128 = vpack.c.b16 %v120, %v116
      %vm137 = vcmask 261120
      %v139 = vsel %vm137, %v66, 0
      %141 = vmatprep.subr.bf16.mxu0 %v122
      %142 = vmatpush1.bf16.msra.mxu0 %v121
      %143 = vmatprep.subr.bf16.mxu0 %v126
      %144 = vmatpush1.bf16.msra.mxu0 %v125
      %145 = vmatprep.subr.bf16.mxu0 0
      %146 = vmatpush1.bf16.msra.mxu0 0
      %147 = vmatprep.subr.bf16.mxu0 0
      %148 = vmatpush1.bf16.msra.mxu0 0
      %149 = vmatprep.subr.bf16.mxu0 0
      %150 = vmatpush1.bf16.msra.mxu0 0
      %151 = vmatprep.subr.bf16.mxu0 0
      %152 = vmatpush1.bf16.msra.mxu0 0
      %153 = vmatprep.subr.bf16.mxu0 0
      %154 = vmatpush1.bf16.msra.mxu0 0
      %155 = vmatprep.subr.bf16.mxu0 0
      %156 = vmatpush1.bf16.msra.mxu0 0
      %157 = vmatprep.subr.bf16.mxu0 0
      %158 = vmatpush1.bf16.msra.mxu0 0
      %159 = vmatprep.subr.bf16.mxu0 0
      %160 = vmatpush1.bf16.msra.mxu0 0
      %161 = vmatprep.subr.bf16.mxu0 0
      %162 = vmatpush1.bf16.msra.mxu0 0
      %163 = vmatprep.subr.bf16.mxu0 0
      %164 = vmatpush1.bf16.msra.mxu0 0
      %165 = vmatprep.subr.bf16.mxu0 0
      %166 = vmatpush1.bf16.msra.mxu0 0
      %167 = vmatprep.subr.bf16.mxu0 0
      %168 = vmatpush1.bf16.msra.mxu0 0
      %169 = vmatprep.subr.bf16.mxu0 0
      %170 = vmatpush1.bf16.msra.mxu0 0
      %171 = vmatprep.subr.bf16.mxu0 0
      %172 = vmatpush1.bf16.msra.mxu0 0
      %173 = vmatprep.mubr.bf16.mxu0 0
      %174 = vmatmul.mubr.bf16.gmra.mrb[0].mxu0 %v139
      %v175 = vpop.f32.mrb[0].mxu0
      %v176 = vadd.f32 %v80, %v175
      %v177 = vpop.f32.mrb[0].mxu0
      %v178 = vadd.f32 %v84, %v177
      %v179 = vpop.f32.mrb[0].mxu0
      %v180 = vpop.f32.mrb[0].mxu0
      %181 = vdwg.mxu0
      %182 = vmatprep.subr.bf16.mxu0 %v124
      %183 = vmatpush1.bf16.msra.mxu0 %v123
      %184 = vmatprep.subr.bf16.mxu0 %v128
      %185 = vmatpush1.bf16.msra.mxu0 %v127
      %186 = vmatprep.subr.bf16.mxu0 0
      %187 = vmatpush1.bf16.msra.mxu0 0
      %188 = vmatprep.subr.bf16.mxu0 0
      %189 = vmatpush1.bf16.msra.mxu0 0
      %190 = vmatprep.subr.bf16.mxu0 0
      %191 = vmatpush1.bf16.msra.mxu0 0
      %192 = vmatprep.subr.bf16.mxu0 0
      %193 = vmatpush1.bf16.msra.mxu0 0
      %194 = vmatprep.subr.bf16.mxu0 0
      %195 = vmatpush1.bf16.msra.mxu0 0
      %196 = vmatprep.subr.bf16.mxu0 0
      %197 = vmatpush1.bf16.msra.mxu0 0
      %198 = vmatprep.subr.bf16.mxu0 0
      %199 = vmatpush1.bf16.msra.mxu0 0
      %200 = vmatprep.subr.bf16.mxu0 0
      %201 = vmatpush1.bf16.msra.mxu0 0
      %202 = vmatprep.subr.bf16.mxu0 0
      %203 = vmatpush1.bf16.msra.mxu0 0
      %204 = vmatprep.subr.bf16.mxu0 0
      %205 = vmatpush1.bf16.msra.mxu0 0
      %206 = vmatprep.subr.bf16.mxu0 0
      %207 = vmatpush1.bf16.msra.mxu0 0
      %208 = vmatprep.subr.bf16.mxu0 0
      %209 = vmatpush1.bf16.msra.mxu0 0
      %210 = vmatprep.subr.bf16.mxu0 0
      %211 = vmatpush1.bf16.msra.mxu0 0
      %212 = vmatprep.subr.bf16.mxu0 0
      %213 = vmatpush1.bf16.msra.mxu0 0
      %214 = vmatprep.mubr.bf16.mxu0 0
      %215 = vmatmul.mubr.bf16.gmra.mrb[0].mxu0 %v139
      %v216 = vpop.f32.mrb[0].mxu0
      %v217 = vadd.f32 %v88, %v216
      %v218 = vpop.f32.mrb[0].mxu0
      %v219 = vadd.f32 %v92, %v218
      %v220 = vpop.f32.mrb[0].mxu0
      %v221 = vpop.f32.mrb[0].mxu0
      %222 = vdwg.mxu0
      %v223 = vmax.f32 %v176, 0.0
      %v224 = vmax.f32 %v178, 0.0
      %v225 = vmax.f32 %v217, 0.0
      %v226 = vmax.f32 %v219, 0.0
      %227 = vst [vmem:[#allocation2] sm:$0xff] %v223
      %228 = vst [vmem:[#allocation2 + $0x8] sm:$0xff] %v224
      %229 = vst [vmem:[#allocation2 + $0x10] sm:$0xff] %v225
      %230 = vst [vmem:[#allocation2 + $0x18] sm:$0xff] %v226
    $region37: #{tpu_custom_call.1} parent=1 // pred_fallthru
      _
    %v231 = vld [vmem:[#allocation2] sm:$0xff]
    %v232 = vld [vmem:[#allocation2 + $0x8] sm:$0xff]
    %v233 = vld [vmem:[#allocation2 + $0x10] sm:$0xff]
    %v234 = vld [vmem:[#allocation2 + $0x18] sm:$0xff]
    %v235 = vpack.c.bf16 %v231, %v231
    %v236 = vpack.c.bf16 %v232, %v232
    %v237 = vpack.c.bf16 %v233, %v233
    %v238 = vpack.c.bf16 %v234, %v234
    %v239 = vld [vmem:[#allocation8] sm:$0xf]
    %v240 = vld [vmem:[#allocation8 + $0x4] sm:$0xf]
    %v241 = vld [vmem:[#allocation8 + $0x8] sm:$0xf]
    %v242 = vld [vmem:[#allocation8 + $0xc] sm:$0xf]
    %v243 = vld [vmem:[#allocation8 + $0x10] sm:$0xf]
    %v244 = vld [vmem:[#allocation8 + $0x14] sm:$0xf]
    %v245 = vld [vmem:[#allocation8 + $0x18] sm:$0xf]
    %v246 = vld [vmem:[#allocation8 + $0x1c] sm:$0xf]
    %v247 = vld [vmem:[#allocation8 + $0x20] sm:$0xf]
    %v248 = vld [vmem:[#allocation8 + $0x24] sm:$0xf]
    %v249 = vld [vmem:[#allocation8 + $0x28] sm:$0xf]
    %v250 = vld [vmem:[#allocation8 + $0x2c] sm:$0xf]
    %v251 = vld [vmem:[#allocation8 + $0x30] sm:$0xf]
    %v252 = vld [vmem:[#allocation8 + $0x34] sm:$0xf]
    %v253 = vld [vmem:[#allocation8 + $0x38] sm:$0xf]
    %v254 = vld [vmem:[#allocation8 + $0x3c] sm:$0xf]
    %v255 = vld [vmem:[#allocation8 + $0x40] sm:$0xf]
    %v256 = vld [vmem:[#allocation8 + $0x44] sm:$0xf]
    %v257 = vld [vmem:[#allocation8 + $0x48] sm:$0xf]
    %v258 = vld [vmem:[#allocation8 + $0x4c] sm:$0xf]
    %v259 = vld [vmem:[#allocation8 + $0x50] sm:$0xf]
    %v260 = vld [vmem:[#allocation8 + $0x54] sm:$0xf]
    %v261 = vld [vmem:[#allocation8 + $0x58] sm:$0xf]
    %v262 = vld [vmem:[#allocation8 + $0x5c] sm:$0xf]
    %v263 = vld [vmem:[#allocation8 + $0x60] sm:$0xf]
    %v264 = vld [vmem:[#allocation8 + $0x64] sm:$0xf]
    %v265 = vld [vmem:[#allocation8 + $0x68] sm:$0xf]
    %v266 = vld [vmem:[#allocation8 + $0x6c] sm:$0xf]
    %v267 = vld [vmem:[#allocation8 + $0x70] sm:$0xf]
    %v268 = vld [vmem:[#allocation8 + $0x74] sm:$0xf]
    %v269 = vld [vmem:[#allocation8 + $0x78] sm:$0xf]
    %v270 = vld [vmem:[#allocation8 + $0x7c] sm:$0xf]
    %v271 = vld [vmem:[#allocation8 + $0x80] sm:$0xf]
    %v272 = vld [vmem:[#allocation8 + $0x84] sm:$0xf]
    %v273 = vld [vmem:[#allocation8 + $0x88] sm:$0xf]
    %v274 = vld [vmem:[#allocation8 + $0x8c] sm:$0xf]
    %v275 = vld [vmem:[#allocation8 + $0x90] sm:$0xf]
    %v276 = vld [vmem:[#allocation8 + $0x94] sm:$0xf]
    %v277 = vld [vmem:[#allocation8 + $0x98] sm:$0xf]
    %v278 = vld [vmem:[#allocation8 + $0x9c] sm:$0xf]
    %v279 = vld [vmem:[#allocation8 + $0xa0] sm:$0xf]
    %v280 = vld [vmem:[#allocation8 + $0xa4] sm:$0xf]
    %v281 = vld [vmem:[#allocation8 + $0xa8] sm:$0xf]
    %v282 = vld [vmem:[#allocation8 + $0xac] sm:$0xf]
    %v283 = vld [vmem:[#allocation8 + $0xb0] sm:$0xf]
    %v284 = vld [vmem:[#allocation8 + $0xb4] sm:$0xf]
    %v285 = vld [vmem:[#allocation8 + $0xb8] sm:$0xf]
    %v286 = vld [vmem:[#allocation8 + $0xbc] sm:$0xf]
    %v287 = vld [vmem:[#allocation8 + $0xc0] sm:$0xf]
    %v288 = vld [vmem:[#allocation8 + $0xc4] sm:$0xf]
    %v289 = vld [vmem:[#allocation8 + $0xc8] sm:$0xf]
    %v290 = vld [vmem:[#allocation8 + $0xcc] sm:$0xf]
    %v291 = vld [vmem:[#allocation8 + $0xd0] sm:$0xf]
    %v292 = vld [vmem:[#allocation8 + $0xd4] sm:$0xf]
    %v293 = vld [vmem:[#allocation8 + $0xd8] sm:$0xf]
    %v294 = vld [vmem:[#allocation8 + $0xdc] sm:$0xf]
    %v295 = vld [vmem:[#allocation8 + $0xe0] sm:$0xf]
    %v296 = vld [vmem:[#allocation8 + $0xe4] sm:$0xf]
    %v297 = vld [vmem:[#allocation8 + $0xe8] sm:$0xf]
    %v298 = vld [vmem:[#allocation8 + $0xec] sm:$0xf]
    %v299 = vld [vmem:[#allocation8 + $0xf0] sm:$0xf]
    %v300 = vld [vmem:[#allocation8 + $0xf4] sm:$0xf]
    %v301 = vld [vmem:[#allocation8 + $0xf8] sm:$0xf]
    %v302 = vld [vmem:[#allocation8 + $0xfc] sm:$0xf]
    %v303 = vld [vmem:[%s4] sm:$0x1]
    %v305 = vlaneseq
    %v306 = vshrl.u32 %v305, 7
    %v307 = vsub.s32 0, %v306
    %v308 = vrot.slane %v303, %v307
    %v374 = vunpack.c.l.b16 %v239
    %v375 = vunpack.c.l.b16 %v240
    %v376 = vunpack.c.l.b16 %v241
    %v377 = vunpack.c.l.b16 %v242
    %v378 = vunpack.c.l.b16 %v243
    %v379 = vunpack.c.l.b16 %v244
    %v380 = vunpack.c.l.b16 %v245
    %v381 = vunpack.c.l.b16 %v246
    %v382 = vunpack.c.l.b16 %v247
    %v383 = vunpack.c.l.b16 %v248
    %v384 = vunpack.c.l.b16 %v249
    %v385 = vunpack.c.l.b16 %v250
    %v386 = vunpack.c.l.b16 %v251
    %v387 = vunpack.c.l.b16 %v252
    %v388 = vunpack.c.l.b16 %v253
    %v389 = vunpack.c.l.b16 %v254
    %v390 = vunpack.c.l.b16 %v255
    %v391 = vunpack.c.l.b16 %v256
    %v392 = vunpack.c.l.b16 %v257
    %v393 = vunpack.c.l.b16 %v258
    %v394 = vunpack.c.l.b16 %v259
    %v395 = vunpack.c.l.b16 %v260
    %v396 = vunpack.c.l.b16 %v261
    %v397 = vunpack.c.l.b16 %v262
    %v398 = vunpack.c.l.b16 %v263
    %v399 = vunpack.c.l.b16 %v264
    %v400 = vunpack.c.l.b16 %v265
    %v401 = vunpack.c.l.b16 %v266
    %v402 = vunpack.c.l.b16 %v267
    %v403 = vunpack.c.l.b16 %v268
    %v404 = vunpack.c.l.b16 %v269
    %v405 = vunpack.c.l.b16 %v270
    %v406 = vunpack.c.l.b16 %v271
    %v407 = vunpack.c.l.b16 %v272
    %v408 = vunpack.c.l.b16 %v273
    %v409 = vunpack.c.l.b16 %v274
    %v410 = vunpack.c.l.b16 %v275
    %v411 = vunpack.c.l.b16 %v276
    %v412 = vunpack.c.l.b16 %v277
    %v413 = vunpack.c.l.b16 %v278
    %v414 = vunpack.c.l.b16 %v279
    %v415 = vunpack.c.l.b16 %v280
    %v416 = vunpack.c.l.b16 %v281
    %v417 = vunpack.c.l.b16 %v282
    %v418 = vunpack.c.l.b16 %v283
    %v419 = vunpack.c.l.b16 %v284
    %v420 = vunpack.c.l.b16 %v285
    %v421 = vunpack.c.l.b16 %v286
    %v422 = vunpack.c.l.b16 %v287
    %v423 = vunpack.c.l.b16 %v288
    %v424 = vunpack.c.l.b16 %v289
    %v425 = vunpack.c.l.b16 %v290
    %v426 = vunpack.c.l.b16 %v291
    %v427 = vunpack.c.l.b16 %v292
    %v428 = vunpack.c.l.b16 %v293
    %v429 = vunpack.c.l.b16 %v294
    %v430 = vunpack.c.l.b16 %v295
    %v431 = vunpack.c.l.b16 %v296
    %v432 = vunpack.c.l.b16 %v297
    %v433 = vunpack.c.l.b16 %v298
    %v434 = vunpack.c.l.b16 %v299
    %v435 = vunpack.c.l.b16 %v300
    %v436 = vunpack.c.l.b16 %v301
    %v437 = vunpack.c.l.b16 %v302
    %v438 = vpack.c.b16 %v375, %v374
    %v439 = vpack.c.b16 %v377, %v376
    %v440 = vpack.c.b16 %v379, %v378
    %v441 = vpack.c.b16 %v381, %v380
    %v442 = vpack.c.b16 %v383, %v382
    %v443 = vpack.c.b16 %v385, %v384
    %v444 = vpack.c.b16 %v387, %v386
    %v445 = vpack.c.b16 %v389, %v388
    %v446 = vpack.c.b16 %v391, %v390
    %v447 = vpack.c.b16 %v393, %v392
    %v448 = vpack.c.b16 %v395, %v394
    %v449 = vpack.c.b16 %v397, %v396
    %v450 = vpack.c.b16 %v399, %v398
    %v451 = vpack.c.b16 %v401, %v400
    %v452 = vpack.c.b16 %v403, %v402
    %v453 = vpack.c.b16 %v405, %v404
    %v454 = vpack.c.b16 %v407, %v406
    %v455 = vpack.c.b16 %v409, %v408
    %v456 = vpack.c.b16 %v411, %v410
    %v457 = vpack.c.b16 %v413, %v412
    %v458 = vpack.c.b16 %v415, %v414
    %v459 = vpack.c.b16 %v417, %v416
    %v460 = vpack.c.b16 %v419, %v418
    %v461 = vpack.c.b16 %v421, %v420
    %v462 = vpack.c.b16 %v423, %v422
    %v463 = vpack.c.b16 %v425, %v424
    %v464 = vpack.c.b16 %v427, %v426
    %v465 = vpack.c.b16 %v429, %v428
    %v466 = vpack.c.b16 %v431, %v430
    %v467 = vpack.c.b16 %v433, %v432
    %v468 = vpack.c.b16 %v435, %v434
    %v469 = vpack.c.b16 %v437, %v436
    %502 = vmatprep.subr.bf16.mxu0 0
    %503 = vmatpush1.bf16.msra.mxu0 %v438
    %504 = vmatprep.subr.bf16.mxu0 0
    %505 = vmatpush1.bf16.msra.mxu0 %v439
    %506 = vmatprep.subr.bf16.mxu0 0
    %507 = vmatpush1.bf16.msra.mxu0 %v440
    %508 = vmatprep.subr.bf16.mxu0 0
    %509 = vmatpush1.bf16.msra.mxu0 %v441
    %510 = vmatprep.subr.bf16.mxu0 0
    %511 = vmatpush1.bf16.msra.mxu0 %v442
    %512 = vmatprep.subr.bf16.mxu0 0
    %513 = vmatpush1.bf16.msra.mxu0 %v443
    %514 = vmatprep.subr.bf16.mxu0 0
    %515 = vmatpush1.bf16.msra.mxu0 %v444
    %516 = vmatprep.subr.bf16.mxu0 0
    %517 = vmatpush1.bf16.msra.mxu0 %v445
    %518 = vmatprep.subr.bf16.mxu0 0
    %519 = vmatpush1.bf16.msra.mxu0 %v446
    %520 = vmatprep.subr.bf16.mxu0 0
    %521 = vmatpush1.bf16.msra.mxu0 %v447
    %522 = vmatprep.subr.bf16.mxu0 0
    %523 = vmatpush1.bf16.msra.mxu0 %v448
    %524 = vmatprep.subr.bf16.mxu0 0
    %525 = vmatpush1.bf16.msra.mxu0 %v449
    %526 = vmatprep.subr.bf16.mxu0 0
    %527 = vmatpush1.bf16.msra.mxu0 %v450
    %528 = vmatprep.subr.bf16.mxu0 0
    %529 = vmatpush1.bf16.msra.mxu0 %v451
    %530 = vmatprep.subr.bf16.mxu0 0
    %531 = vmatpush1.bf16.msra.mxu0 %v452
    %532 = vmatprep.subr.bf16.mxu0 0
    %533 = vmatpush1.bf16.msra.mxu0 %v453
    %534 = vmatprep.mubr.bf16.mxu0 %v236
    %535 = vmatmul.mubr.bf16.gmra.mrb[0].mxu0 %v235
    %v536 = vpop.f32.mrb[0].mxu0
    %v537 = vadd.f32 %v308, %v536
    %v538 = vpop.f32.mrb[0].mxu0
    %v539 = vpop.f32.mrb[0].mxu0
    %v540 = vpop.f32.mrb[0].mxu0
    %541 = vdwg.mxu0
    %542 = vmatprep.subr.bf16.mxu0 0
    %543 = vmatpush1.bf16.msra.mxu0 %v454
    %544 = vmatprep.subr.bf16.mxu0 0
    %545 = vmatpush1.bf16.msra.mxu0 %v455
    %546 = vmatprep.subr.bf16.mxu0 0
    %547 = vmatpush1.bf16.msra.mxu0 %v456
    %548 = vmatprep.subr.bf16.mxu0 0
    %549 = vmatpush1.bf16.msra.mxu0 %v457
    %550 = vmatprep.subr.bf16.mxu0 0
    %551 = vmatpush1.bf16.msra.mxu0 %v458
    %552 = vmatprep.subr.bf16.mxu0 0
    %553 = vmatpush1.bf16.msra.mxu0 %v459
    %554 = vmatprep.subr.bf16.mxu0 0
    %555 = vmatpush1.bf16.msra.mxu0 %v460
    %556 = vmatprep.subr.bf16.mxu0 0
    %557 = vmatpush1.bf16.msra.mxu0 %v461
    %558 = vmatprep.subr.bf16.mxu0 0
    %559 = vmatpush1.bf16.msra.mxu0 %v462
    %560 = vmatprep.subr.bf16.mxu0 0
    %561 = vmatpush1.bf16.msra.mxu0 %v463
    %562 = vmatprep.subr.bf16.mxu0 0
    %563 = vmatpush1.bf16.msra.mxu0 %v464
    %564 = vmatprep.subr.bf16.mxu0 0
    %565 = vmatpush1.bf16.msra.mxu0 %v465
    %566 = vmatprep.subr.bf16.mxu0 0
    %567 = vmatpush1.bf16.msra.mxu0 %v466
    %568 = vmatprep.subr.bf16.mxu0 0
    %569 = vmatpush1.bf16.msra.mxu0 %v467
    %570 = vmatprep.subr.bf16.mxu0 0
    %571 = vmatpush1.bf16.msra.mxu0 %v468
    %572 = vmatprep.subr.bf16.mxu0 0
    %573 = vmatpush1.bf16.msra.mxu0 %v469
    %574 = vmatprep.mubr.bf16.mxu0 %v238
    %575 = vmatmul.mubr.bf16.gmra.mrb[0].mxu0 %v237
    %v576 = vpop.f32.mrb[0].mxu0
    %v577 = vadd.f32 %v537, %v576
    %v578 = vpop.f32.mrb[0].mxu0
    %v579 = vpop.f32.mrb[0].mxu0
    %v580 = vpop.f32.mrb[0].mxu0
    %581 = vdwg.mxu0
    %582 = vst [vmem:[#allocation9] sm:$0xff] %v577
    // Predicated region
    $region38: #{tpu_custom_call.1} parent=1 // pred_check
      _
    $region39: #{tpu_custom_call.1} parent=1 // pred_check_branch
      %584 = sbr.rel (0) target = $region41
    $region40: #{tpu_custom_call.1} parent=1 // pred_region
      %s586 = ssub.s32 128, 128
      %587 = vsyncadd [#allocation5], %s586
      %s589 = sshll.u32 [#allocation9], 4
      %s590 = int_to_ptr.vmem [resolvable:$true] %s589
      %592 = dma.vmem_to_hbm [thread:$0]  %s590, 128, %s5, [#allocation5]
    $region41: #{tpu_custom_call.1} parent=1 // pred_fallthru
      _
    // Predicated region
    $region42: #{tpu_custom_call.1} parent=1 // pred_check
      _
    $region43: #{tpu_custom_call.1} parent=1 // pred_check_branch
      %594 = sbr.rel (0) target = $region45
    $region44: #{tpu_custom_call.1} parent=1 // pred_region
      %595 = dma.done [#allocation5], 128
    $region45: #{tpu_custom_call.1} parent=1 // pred_fallthru
      _
    %596 = vsyncpa [#allocation4], 1
    %597 = vsyncpa [#allocation7], 1
    %598 = vsyncpa [#allocation5], 1

</llo_original>
